<compile_context>
chip_gen: v7x
topology: tpu7x:2x2x1
jax: 0.10.0
libtpu: 0.0.40
codegen_flags: <defaults>
</compile_context>

<pallas_src>
import functools

import jax
import jax.numpy as jnp
from jax.experimental import pallas as pl
from jax.experimental.pallas import tpu as pltpu


# ------------------------------ fused kernel --------------------------------

def _deeponet_kernel(x_ref, t_ref, w_ref, b_ref, out_ref, *,
                     n_branch, n_trunk, in_dims, out_dims, K, M, U, T):
    """Fused branch MLP + trunk MLP + lane-dense combine.

    x_ref : (U, M)           branch input (momenta flattened)
    t_ref : (T, 1)           trunk input
    w_ref : (L, PAD_IN, PAD_OUT)  all weights, zero padded, branch layers first
    b_ref : (L, PAD_OUT)          all biases, zero padded
    out_ref: (U, T*M)        flat output; out[u, t*M + m] = output[u, t, m]
    The last branch layer's columns are pre-permuted to (K, N, dim) order.
    """

    def linear(z, li, activate):
        din, dout = in_dims[li], out_dims[li]
        w = w_ref[li, :din, :dout]          # (din, dout) static sub-window
        b = b_ref[li:li + 1, :dout]         # (1, dout)
        if din <= 8:
            # Tiny contraction: VPU broadcast-FMA, skip the MXU entirely.
            y = b
            for i in range(din):
                y = y + z[:, i:i + 1] * w[i:i + 1, :]
        else:
            y = jnp.dot(z, w, preferred_element_type=jnp.float32) + b
        return jnp.tanh(y) if activate else y

    # branch MLP: (U, N*dim) -> (U, K*M)   (columns in (k, n, d) order)
    zb = x_ref[...]
    for li in range(n_branch):
        zb = linear(zb, li, activate=(li < n_branch - 1))

    # trunk MLP: (T, 1) -> (T, K)
    zt = t_ref[...]
    for li in range(n_trunk):
        zt = linear(zt, n_branch + li, activate=(li < n_trunk - 1))

    # Lane-dense combine into the flat (U, T*M) slab:
    #   acc[u, t*M + m] = sum_k zb[u, k*M + m] * zt[t, k]
    # Branch slice is lane-tiled T times (pure lane concat); zt column k is first
    # lane-broadcast to (T, M) then folded row->lane via concat (O(T), toy T only).
    acc = jnp.zeros((U, T * M), jnp.float32)
    for k in range(K):
        bk = zb[:, k * M:(k + 1) * M]                                   # (U, M)
        bk_t = jnp.concatenate([bk] * T, axis=-1)                       # (U, T*M)
        ztk = jnp.broadcast_to(zt[:, k:k + 1], (T, M))                  # (T, M)
        tk = jnp.concatenate([ztk[r:r + 1, :] for r in range(T)],
                             axis=-1)                                   # (1, T*M)
        acc = acc + bk_t * tk
    out_ref[...] = acc.astype(out_ref.dtype)


# ------------------------------ model wrapper -------------------------------

def deeponet_forward(momenta, t, branch_params, trunk_params, *, N, dim, K):
    U = momenta.shape[0]
    T = t.shape[0]
    M = N * dim

    # Permute the last branch layer's output columns from (N, dim, K) to
    # (K, N, dim) order so the kernel can take contiguous per-k slices and emit
    # the final (U, T, N*dim) layout directly (no wrapper transpose on the output).
    bp = list(branch_params)
    w_last, b_last = bp[-1]
    h = w_last.shape[0]
    w_last_p = (w_last.reshape(h, N, dim, K)
                      .transpose(0, 3, 1, 2)
                      .reshape(h, K * M))
    b_last_p = (b_last.reshape(N, dim, K)
                      .transpose(2, 0, 1)
                      .reshape(K * M))
    bp[-1] = (w_last_p, b_last_p)
    tp = list(trunk_params)

    # Pack all layers (branch first, then trunk) into one padded weight stack and
    # one padded bias stack -> 4 input DMAs instead of 14.
    layers = bp + tp
    n_layers = len(layers)
    in_dims = tuple(int(w.shape[0]) for w, _ in layers)
    out_dims = tuple(int(w.shape[1]) for w, _ in layers)
    pad_in = max(8, max(in_dims))
    pad_out = max(128, max(out_dims))

    w_pack = jnp.zeros((n_layers, pad_in, pad_out), jnp.float32)
    b_pack = jnp.zeros((n_layers, pad_out), jnp.float32)
    for li, (w, b) in enumerate(layers):
        w_pack = w_pack.at[li, :w.shape[0], :w.shape[1]].set(w.astype(jnp.float32))
        b_pack = b_pack.at[li, :b.shape[0]].set(b.astype(jnp.float32))

    x = momenta.reshape(U, M).astype(jnp.float32)
    t2 = t.astype(jnp.float32)

    n_branch, n_trunk = len(bp), len(tp)
    kernel = functools.partial(
        _deeponet_kernel,
        n_branch=n_branch, n_trunk=n_trunk,
        in_dims=in_dims, out_dims=out_dims, K=K, M=M, U=U, T=T)

    # Advisory cost estimate so XLA can schedule/overlap this tiny custom call.
    flops = (sum(2 * U * in_dims[i] * out_dims[i] for i in range(n_branch))
             + sum(2 * T * in_dims[n_branch + i] * out_dims[n_branch + i]
                   for i in range(n_trunk))
             + 2 * U * T * M * K)
    transcendentals = (sum(U * out_dims[i] for i in range(n_branch - 1))
                       + sum(T * out_dims[n_branch + i] for i in range(n_trunk - 1)))
    bytes_accessed = int(x.size * 4 + t2.size * 4 + w_pack.size * 4
                         + b_pack.size * 4 + U * T * M * 4)

    vmem_spec = pl.BlockSpec(memory_space=pltpu.MemorySpace.VMEM)
    out_flat = pl.pallas_call(
        kernel,
        out_shape=jax.ShapeDtypeStruct((U, T * M), jnp.float32),
        in_specs=[vmem_spec] * 4,
        out_specs=vmem_spec,
        cost_estimate=pl.CostEstimate(flops=flops,
                                      transcendentals=transcendentals,
                                      bytes_accessed=bytes_accessed),
    )(x, t2, w_pack, b_pack)

    # Free metadata reshape: (U, T*M) -> (U, T, N, dim)
    return out_flat.reshape(U, T, N, dim)


# ------------------------------ param init ----------------------------------

def xavier_normal(key, fan_in, fan_out):
    std = (2.0 / (fan_in + fan_out)) ** 0.5
    return std * jax.random.normal(key, (fan_in, fan_out), jnp.float32)


def init_mlp(key, sizes):
    params = []
    for i in range(1, len(sizes)):
        key, sub = jax.random.split(key)
        w = xavier_normal(sub, sizes[i - 1], sizes[i])
        b = jnp.zeros((sizes[i],), jnp.float32)
        params.append((w, b))
    return params


# --------------------------------- main --------------------------------------

if __name__ == "__main__":
    # DeepONet(layer_sizes_branch=[32,32], layer_sizes_trunk=[32,32], K=2,
    #          activation='tanh', scheme=None, N=1)  with dim=2.
    N, dim, K = 1, 2, 2
    layer_sizes_branch = [32, 32]
    layer_sizes_trunk = [32, 32]
    U, T = 8, 8

    key = jax.random.PRNGKey(0)
    k_branch, k_trunk, k_mom, k_t = jax.random.split(key, 4)

    branch_sizes = [dim * N] + layer_sizes_branch + [dim * K * N]
    trunk_sizes = [1] + layer_sizes_trunk + [K]
    branch_params = init_mlp(k_branch, branch_sizes)
    trunk_params = init_mlp(k_trunk, trunk_sizes)

    momenta = jax.random.normal(k_mom, (U, N, dim), jnp.float32)
    t = jax.random.normal(k_t, (T, 1), jnp.float32)

    out = deeponet_forward(momenta, t, branch_params, trunk_params,
                           N=N, dim=dim, K=K)
    out = jax.block_until_ready(out)

    # Pure-JAX reference for a correctness check (regression guard for the
    # last-layer column permutation).
    def ref_mlp(z, params):
        for i, (w, b) in enumerate(params):
            z = z @ w + b
            if i < len(params) - 1:
                z = jnp.tanh(z)
        return z

    bo = ref_mlp(momenta.reshape(U, -1), branch_params).reshape(U, N, dim, K)
    to = ref_mlp(t, trunk_params)
    ref = jnp.einsum('uNdK,tK->utNd', bo, to)

    assert out.shape == (U, T, N, dim), out.shape
    assert jnp.allclose(out, ref, atol=1e-5, rtol=1e-5), \
        float(jnp.max(jnp.abs(out - ref)))
    print("KERNEL_OK")
</pallas_src>

<mosaic_0001>
module attributes {stable_mosaic.version = 11 : i64} {
  func.func @_deeponet_kernel(%arg0: memref<8x2xf32, #tpu.memory_space<vmem>>, %arg1: memref<8x1xf32, #tpu.memory_space<vmem>>, %arg2: memref<6x32x128xf32, #tpu.memory_space<vmem>>, %arg3: memref<6x128xf32, #tpu.memory_space<vmem>>, %arg4: memref<8x16xf32, #tpu.memory_space<vmem>>) attributes {dimension_semantics = [], scalar_prefetch = 0 : i64, scratch_operands = 0 : i64, tpu.core_type = #tpu.core_type<tc>} {
    %c0 = arith.constant 0 : index
    %c0_0 = arith.constant 0 : index
    %0 = vector.load %arg0[%c0, %c0_0] : memref<8x2xf32, #tpu.memory_space<vmem>>, vector<8x2xf32>
    %c0_1 = arith.constant 0 : index
    %c0_2 = arith.constant 0 : index
    %c0_3 = arith.constant 0 : index
    %1 = vector.load %arg2[%c0_1, %c0_2, %c0_3] : memref<6x32x128xf32, #tpu.memory_space<vmem>>, vector<1x2x32xf32>
    %2 = vector.shape_cast %1 : vector<1x2x32xf32> to vector<2x32xf32>
    %c0_4 = arith.constant 0 : index
    %c0_5 = arith.constant 0 : index
    %3 = vector.load %arg3[%c0_4, %c0_5] : memref<6x128xf32, #tpu.memory_space<vmem>>, vector<1x32xf32>
    %4 = vector.extract_strided_slice %0 {offsets = [0, 0], sizes = [8, 1], strides = [1, 1]} : vector<8x2xf32> to vector<8x1xf32>
    %5 = vector.extract_strided_slice %2 {offsets = [0, 0], sizes = [1, 32], strides = [1, 1]} : vector<2x32xf32> to vector<1x32xf32>
    %6 = vector.broadcast %4 : vector<8x1xf32> to vector<8x32xf32>
    %7 = vector.broadcast %5 : vector<1x32xf32> to vector<8x32xf32>
    %8 = arith.mulf %6, %7 : vector<8x32xf32>
    %9 = vector.broadcast %3 : vector<1x32xf32> to vector<8x32xf32>
    %10 = arith.addf %9, %8 : vector<8x32xf32>
    %11 = vector.extract_strided_slice %0 {offsets = [0, 1], sizes = [8, 1], strides = [1, 1]} : vector<8x2xf32> to vector<8x1xf32>
    %12 = vector.extract_strided_slice %2 {offsets = [1, 0], sizes = [1, 32], strides = [1, 1]} : vector<2x32xf32> to vector<1x32xf32>
    %13 = vector.broadcast %11 : vector<8x1xf32> to vector<8x32xf32>
    %14 = vector.broadcast %12 : vector<1x32xf32> to vector<8x32xf32>
    %15 = arith.mulf %13, %14 : vector<8x32xf32>
    %16 = arith.addf %10, %15 : vector<8x32xf32>
    %17 = math.tanh %16 : vector<8x32xf32>
    %c1 = arith.constant 1 : index
    %c0_6 = arith.constant 0 : index
    %c0_7 = arith.constant 0 : index
    %18 = vector.load %arg2[%c1, %c0_6, %c0_7] : memref<6x32x128xf32, #tpu.memory_space<vmem>>, vector<1x32x32xf32>
    %19 = vector.shape_cast %18 : vector<1x32x32xf32> to vector<32x32xf32>
    %c1_8 = arith.constant 1 : index
    %c0_9 = arith.constant 0 : index
    %20 = vector.load %arg3[%c1_8, %c0_9] : memref<6x128xf32, #tpu.memory_space<vmem>>, vector<1x32xf32>
    %cst = arith.constant dense<0.000000e+00> : vector<8x32xf32>
    %21 = tpu.matmul %17, %19, %cst {dimension_numbers = #tpu.dot_dimension_numbers<[1], [0], [0], [1], [0, 0, 1, 1], [], []>} : vector<8x32xf32>, vector<32x32xf32>, vector<8x32xf32> -> vector<8x32xf32>
    %22 = vector.broadcast %20 : vector<1x32xf32> to vector<8x32xf32>
    %23 = arith.addf %21, %22 : vector<8x32xf32>
    %24 = math.tanh %23 : vector<8x32xf32>
    %c2 = arith.constant 2 : index
    %c0_10 = arith.constant 0 : index
    %c0_11 = arith.constant 0 : index
    %25 = vector.load %arg2[%c2, %c0_10, %c0_11] : memref<6x32x128xf32, #tpu.memory_space<vmem>>, vector<1x32x4xf32>
    %26 = vector.shape_cast %25 : vector<1x32x4xf32> to vector<32x4xf32>
    %c2_12 = arith.constant 2 : index
    %c0_13 = arith.constant 0 : index
    %27 = vector.load %arg3[%c2_12, %c0_13] : memref<6x128xf32, #tpu.memory_space<vmem>>, vector<1x4xf32>
    %cst_14 = arith.constant dense<0.000000e+00> : vector<8x4xf32>
    %28 = tpu.matmul %24, %26, %cst_14 {dimension_numbers = #tpu.dot_dimension_numbers<[1], [0], [0], [1], [0, 0, 1, 1], [], []>} : vector<8x32xf32>, vector<32x4xf32>, vector<8x4xf32> -> vector<8x4xf32>
    %29 = vector.broadcast %27 : vector<1x4xf32> to vector<8x4xf32>
    %30 = arith.addf %28, %29 : vector<8x4xf32>
    %c0_15 = arith.constant 0 : index
    %c0_16 = arith.constant 0 : index
    %31 = vector.load %arg1[%c0_15, %c0_16] : memref<8x1xf32, #tpu.memory_space<vmem>>, vector<8x1xf32>
    %c3 = arith.constant 3 : index
    %c0_17 = arith.constant 0 : index
    %c0_18 = arith.constant 0 : index
    %32 = vector.load %arg2[%c3, %c0_17, %c0_18] : memref<6x32x128xf32, #tpu.memory_space<vmem>>, vector<1x1x32xf32>
    %33 = vector.shape_cast %32 : vector<1x1x32xf32> to vector<1x32xf32>
    %c3_19 = arith.constant 3 : index
    %c0_20 = arith.constant 0 : index
    %34 = vector.load %arg3[%c3_19, %c0_20] : memref<6x128xf32, #tpu.memory_space<vmem>>, vector<1x32xf32>
    %35 = vector.broadcast %31 : vector<8x1xf32> to vector<8x32xf32>
    %36 = vector.broadcast %33 : vector<1x32xf32> to vector<8x32xf32>
    %37 = arith.mulf %35, %36 : vector<8x32xf32>
    %38 = vector.broadcast %34 : vector<1x32xf32> to vector<8x32xf32>
    %39 = arith.addf %38, %37 : vector<8x32xf32>
    %40 = math.tanh %39 : vector<8x32xf32>
    %c4 = arith.constant 4 : index
    %c0_21 = arith.constant 0 : index
    %c0_22 = arith.constant 0 : index
    %41 = vector.load %arg2[%c4, %c0_21, %c0_22] : memref<6x32x128xf32, #tpu.memory_space<vmem>>, vector<1x32x32xf32>
    %42 = vector.shape_cast %41 : vector<1x32x32xf32> to vector<32x32xf32>
    %c4_23 = arith.constant 4 : index
    %c0_24 = arith.constant 0 : index
    %43 = vector.load %arg3[%c4_23, %c0_24] : memref<6x128xf32, #tpu.memory_space<vmem>>, vector<1x32xf32>
    %cst_25 = arith.constant dense<0.000000e+00> : vector<8x32xf32>
    %44 = tpu.matmul %40, %42, %cst_25 {dimension_numbers = #tpu.dot_dimension_numbers<[1], [0], [0], [1], [0, 0, 1, 1], [], []>} : vector<8x32xf32>, vector<32x32xf32>, vector<8x32xf32> -> vector<8x32xf32>
    %45 = vector.broadcast %43 : vector<1x32xf32> to vector<8x32xf32>
    %46 = arith.addf %44, %45 : vector<8x32xf32>
    %47 = math.tanh %46 : vector<8x32xf32>
    %c5 = arith.constant 5 : index
    %c0_26 = arith.constant 0 : index
    %c0_27 = arith.constant 0 : index
    %48 = vector.load %arg2[%c5, %c0_26, %c0_27] : memref<6x32x128xf32, #tpu.memory_space<vmem>>, vector<1x32x2xf32>
    %49 = vector.shape_cast %48 : vector<1x32x2xf32> to vector<32x2xf32>
    %c5_28 = arith.constant 5 : index
    %c0_29 = arith.constant 0 : index
    %50 = vector.load %arg3[%c5_28, %c0_29] : memref<6x128xf32, #tpu.memory_space<vmem>>, vector<1x2xf32>
    %cst_30 = arith.constant dense<0.000000e+00> : vector<8x2xf32>
    %51 = tpu.matmul %47, %49, %cst_30 {dimension_numbers = #tpu.dot_dimension_numbers<[1], [0], [0], [1], [0, 0, 1, 1], [], []>} : vector<8x32xf32>, vector<32x2xf32>, vector<8x2xf32> -> vector<8x2xf32>
    %52 = vector.broadcast %50 : vector<1x2xf32> to vector<8x2xf32>
    %53 = arith.addf %51, %52 : vector<8x2xf32>
    %cst_31 = arith.constant 0.000000e+00 : f32
    %54 = vector.broadcast %cst_31 : f32 to vector<8x16xf32>
    %55 = vector.extract_strided_slice %30 {offsets = [0, 0], sizes = [8, 2], strides = [1, 1]} : vector<8x4xf32> to vector<8x2xf32>
    %56 = tpu.concatenate %55, %55, %55, %55, %55, %55, %55, %55 in 1 : vector<8x2xf32>, vector<8x2xf32>, vector<8x2xf32>, vector<8x2xf32>, vector<8x2xf32>, vector<8x2xf32>, vector<8x2xf32>, vector<8x2xf32> -> vector<8x16xf32>
    %57 = vector.extract_strided_slice %53 {offsets = [0, 0], sizes = [8, 1], strides = [1, 1]} : vector<8x2xf32> to vector<8x1xf32>
    %58 = vector.shape_cast %57 : vector<8x1xf32> to vector<8x1xf32>
    %59 = vector.broadcast %58 : vector<8x1xf32> to vector<8x2xf32>
    %60 = vector.extract_strided_slice %59 {offsets = [0, 0], sizes = [1, 2], strides = [1, 1]} : vector<8x2xf32> to vector<1x2xf32>
    %61 = vector.extract_strided_slice %59 {offsets = [1, 0], sizes = [1, 2], strides = [1, 1]} : vector<8x2xf32> to vector<1x2xf32>
    %62 = vector.extract_strided_slice %59 {offsets = [2, 0], sizes = [1, 2], strides = [1, 1]} : vector<8x2xf32> to vector<1x2xf32>
    %63 = vector.extract_strided_slice %59 {offsets = [3, 0], sizes = [1, 2], strides = [1, 1]} : vector<8x2xf32> to vector<1x2xf32>
    %64 = vector.extract_strided_slice %59 {offsets = [4, 0], sizes = [1, 2], strides = [1, 1]} : vector<8x2xf32> to vector<1x2xf32>
    %65 = vector.extract_strided_slice %59 {offsets = [5, 0], sizes = [1, 2], strides = [1, 1]} : vector<8x2xf32> to vector<1x2xf32>
    %66 = vector.extract_strided_slice %59 {offsets = [6, 0], sizes = [1, 2], strides = [1, 1]} : vector<8x2xf32> to vector<1x2xf32>
    %67 = vector.extract_strided_slice %59 {offsets = [7, 0], sizes = [1, 2], strides = [1, 1]} : vector<8x2xf32> to vector<1x2xf32>
    %68 = tpu.concatenate %60, %61, %62, %63, %64, %65, %66, %67 in 1 : vector<1x2xf32>, vector<1x2xf32>, vector<1x2xf32>, vector<1x2xf32>, vector<1x2xf32>, vector<1x2xf32>, vector<1x2xf32>, vector<1x2xf32> -> vector<1x16xf32>
    %69 = vector.broadcast %68 : vector<1x16xf32> to vector<8x16xf32>
    %70 = arith.mulf %56, %69 : vector<8x16xf32>
    %71 = arith.addf %54, %70 : vector<8x16xf32>
    %72 = vector.extract_strided_slice %30 {offsets = [0, 2], sizes = [8, 2], strides = [1, 1]} : vector<8x4xf32> to vector<8x2xf32>
    %73 = tpu.concatenate %72, %72, %72, %72, %72, %72, %72, %72 in 1 : vector<8x2xf32>, vector<8x2xf32>, vector<8x2xf32>, vector<8x2xf32>, vector<8x2xf32>, vector<8x2xf32>, vector<8x2xf32>, vector<8x2xf32> -> vector<8x16xf32>
    %74 = vector.extract_strided_slice %53 {offsets = [0, 1], sizes = [8, 1], strides = [1, 1]} : vector<8x2xf32> to vector<8x1xf32>
    %75 = vector.shape_cast %74 : vector<8x1xf32> to vector<8x1xf32>
    %76 = vector.broadcast %75 : vector<8x1xf32> to vector<8x2xf32>
    %77 = vector.extract_strided_slice %76 {offsets = [0, 0], sizes = [1, 2], strides = [1, 1]} : vector<8x2xf32> to vector<1x2xf32>
    %78 = vector.extract_strided_slice %76 {offsets = [1, 0], sizes = [1, 2], strides = [1, 1]} : vector<8x2xf32> to vector<1x2xf32>
    %79 = vector.extract_strided_slice %76 {offsets = [2, 0], sizes = [1, 2], strides = [1, 1]} : vector<8x2xf32> to vector<1x2xf32>
    %80 = vector.extract_strided_slice %76 {offsets = [3, 0], sizes = [1, 2], strides = [1, 1]} : vector<8x2xf32> to vector<1x2xf32>
    %81 = vector.extract_strided_slice %76 {offsets = [4, 0], sizes = [1, 2], strides = [1, 1]} : vector<8x2xf32> to vector<1x2xf32>
    %82 = vector.extract_strided_slice %76 {offsets = [5, 0], sizes = [1, 2], strides = [1, 1]} : vector<8x2xf32> to vector<1x2xf32>
    %83 = vector.extract_strided_slice %76 {offsets = [6, 0], sizes = [1, 2], strides = [1, 1]} : vector<8x2xf32> to vector<1x2xf32>
    %84 = vector.extract_strided_slice %76 {offsets = [7, 0], sizes = [1, 2], strides = [1, 1]} : vector<8x2xf32> to vector<1x2xf32>
    %85 = tpu.concatenate %77, %78, %79, %80, %81, %82, %83, %84 in 1 : vector<1x2xf32>, vector<1x2xf32>, vector<1x2xf32>, vector<1x2xf32>, vector<1x2xf32>, vector<1x2xf32>, vector<1x2xf32>, vector<1x2xf32> -> vector<1x16xf32>
    %86 = vector.broadcast %85 : vector<1x16xf32> to vector<8x16xf32>
    %87 = arith.mulf %73, %86 : vector<8x16xf32>
    %88 = arith.addf %71, %87 : vector<8x16xf32>
    %c0_32 = arith.constant 0 : index
    %c0_33 = arith.constant 0 : index
    %89 = vector.load %arg4[%c0_32, %c0_33] : memref<8x16xf32, #tpu.memory_space<vmem>>, vector<8x16xf32>
    tpu.vector_store %arg4[%c0_32, %c0_33], %88 {strides = array<i32>} : memref<8x16xf32, #tpu.memory_space<vmem>>, vector<8x16xf32>,
    return
  }
}

</mosaic_0001>

<llo_original>
// kernel: tpu_custom_call.1
$region0: #{tpu_custom_call.1}
  #allocation0 [shape = 'u32[]', space=smem, size = 0x4, offset = 0x4, fixed_abs, tag = 'smem constant byte address 0x4 - core index']
  #allocation1 [shape = 'u32[144,128]{1,0:T(1,128)}', space=vmem, size = 0x12000, scoped, tag = 'internal scratch']
  %s0 = inlined_call_operand.vmem [shape: f32[8,2], index: 0, kind: input, shape index: {}]
  %s1 = inlined_call_operand.vmem [shape: f32[8,1], index: 1, kind: input, shape index: {}]
  %s2 = inlined_call_operand.hbm [shape: f32[6,32,128], index: 2, kind: input, shape index: {}]
  %s3 = inlined_call_operand.vmem [shape: f32[6,128], index: 3, kind: input, shape index: {}]
  %s4 = inlined_call_operand.hbm [shape: f32[8,16], index: 4, kind: output, shape index: {}]
  %s5 = sld [smem:[#allocation0]]
  $region30: #{tpu_custom_call.1} parent=0
    _
  %s7 = ssub.s32 1, %s5
  %s8 = scalar_select 0, %s7, %s5
  $region1: #{tpu_custom_call.1} parent=0
    #allocation2 [shape = 'u8[98304]{0}', space=vmem, size = 0x18000, scoped, tag = 'input window, operand 2, single buffered']
    #allocation3 [shape = 's32[1]{0}', space=sflag, size = 0x4, scoped, tag = 'scoped memory for tpu_custom_call.1']
    #allocation4 [shape = 's32[1]{0}', space=sflag, size = 0x4, scoped, tag = 'scoped memory for tpu_custom_call.1']
    #allocation5 [shape = 'u8[4096]{0}', space=vmem, size = 0x1000, scoped, tag = 'output window, operand 0, single buffered']
    %9 = vsyncpa [#allocation3], 0
    %10 = vsyncpa [#allocation4], 0
    // Predicated region
    $region2: #{tpu_custom_call.1} parent=1 // pred_check
      _
    $region3: #{tpu_custom_call.1} parent=1 // pred_check_branch
      %12 = sbr.rel (0) target = $region5
    $region4: #{tpu_custom_call.1} parent=1 // pred_region
      _
    $region5: #{tpu_custom_call.1} parent=1 // pred_fallthru
      _
    // Predicated region
    $region6: #{tpu_custom_call.1} parent=1 // pred_check
      _
    $region7: #{tpu_custom_call.1} parent=1 // pred_check_branch
      %14 = sbr.rel (0) target = $region9
    $region8: #{tpu_custom_call.1} parent=1 // pred_region
      _
    $region9: #{tpu_custom_call.1} parent=1 // pred_fallthru
      _
    // Predicated region
    $region10: #{tpu_custom_call.1} parent=1 // pred_check
      _
    $region11: #{tpu_custom_call.1} parent=1 // pred_check_branch
      %16 = sbr.rel (0) target = $region13
    $region12: #{tpu_custom_call.1} parent=1 // pred_region
      %s18 = ssub.s32 3072, 3072
      %19 = vsyncadd [#allocation3], %s18
      %s20 = sshll.u32 [#allocation2], 4
      %s21 = int_to_ptr.vmem [resolvable:$true] %s20
      %26 = dma.hbm_to_vmem [thread:$0]  %s2, 3072, %s21, [#allocation3], 128, 128, 8
    $region13: #{tpu_custom_call.1} parent=1 // pred_fallthru
      _
    // Predicated region
    $region14: #{tpu_custom_call.1} parent=1 // pred_check
      _
    $region15: #{tpu_custom_call.1} parent=1 // pred_check_branch
      %28 = sbr.rel (0) target = $region17
    $region16: #{tpu_custom_call.1} parent=1 // pred_region
      _
    $region17: #{tpu_custom_call.1} parent=1 // pred_fallthru
      _
    // Predicated region
    $region18: #{tpu_custom_call.1} parent=1 // pred_check
      _
    $region19: #{tpu_custom_call.1} parent=1 // pred_check_branch
      %30 = sbr.rel (0) target = $region21
    $region20: #{tpu_custom_call.1} parent=1 // pred_region
      %31 = dma.done [#allocation3], 3072
    $region21: #{tpu_custom_call.1} parent=1 // pred_fallthru
      _
    %v32 = vld [vmem:[%s0] sm:$0xff]
    %v33 = vld [vmem:[#allocation2] sm:$0x3]
    %v34 = vld [vmem:[%s3] sm:$0x1]
    %36 = vset.pattern.permute.xlu0 0
    %37 = vperm.xlu0 %36, %v32
    %v38 = vpop.permute.xlu0 %37
    %v40 = vlaneseq
    %v41 = vshrl.u32 %v40, 7
    %v42 = vsub.s32 0, %v41
    %v43 = vrot.slane %v33, %v42
    %v44 = vmul.f32 %v38, %v43
    %v45 = vlaneseq
    %v46 = vshrl.u32 %v45, 7
    %v47 = vsub.s32 0, %v46
    %v48 = vrot.slane %v34, %v47
    %v49 = vadd.f32 %v48, %v44
    %50 = vset.pattern.permute.xlu0 1
    %51 = vperm.xlu0 %50, %v32
    %v52 = vpop.permute.xlu0 %51
    %v54 = vlaneseq
    %v55 = vshrl.u32 %v54, 7
    %v56 = vsub.s32 1, %v55
    %v57 = vrot.slane %v33, %v56
    %v58 = vmul.f32 %v52, %v57
    %v59 = vadd.f32 %v49, %v58
    %v60 = vtanh.pop %v59
    %s61 = scalar_lea.vmem [#allocation2], 32
    %v62 = vld [vmem:[%s61] sm:$0xff]
    %v63 = vld [vmem:[%s61 + $0x8] sm:$0xff]
    %v64 = vld [vmem:[%s61 + $0x10] sm:$0xff]
    %v65 = vld [vmem:[%s61 + $0x18] sm:$0xff]
    %v66 = vld [vmem:[%s3 + $0x1] sm:$0x1]
    %v67 = vlaneseq
    %v68 = vshrl.u32 %v67, 7
    %v69 = vsub.s32 0, %v68
    %v70 = vrot.slane %v66, %v69
    %vm71 = vcmask 261120
    %v73 = vsel %vm71, %v60, 0
    %75 = vmatprep.subr.mxu0 0.0
    %76 = vmatpush1.msra.mxu0 %v62
    %77 = vmatprep.subr.mxu0 0.0
    %78 = vmatpush1.msra.mxu0 %v63
    %79 = vmatprep.subr.mxu0 0.0
    %80 = vmatpush1.msra.mxu0 %v64
    %81 = vmatprep.subr.mxu0 0.0
    %82 = vmatpush1.msra.mxu0 %v65
    %83 = vmatprep.subr.mxu0 0.0
    %84 = vmatpush1.msra.mxu0 0.0
    %85 = vmatprep.subr.mxu0 0.0
    %86 = vmatpush1.msra.mxu0 0.0
    %87 = vmatprep.subr.mxu0 0.0
    %88 = vmatpush1.msra.mxu0 0.0
    %89 = vmatprep.subr.mxu0 0.0
    %90 = vmatpush1.msra.mxu0 0.0
    %91 = vmatprep.subr.mxu0 0.0
    %92 = vmatpush1.msra.mxu0 0.0
    %93 = vmatprep.subr.mxu0 0.0
    %94 = vmatpush1.msra.mxu0 0.0
    %95 = vmatprep.subr.mxu0 0.0
    %96 = vmatpush1.msra.mxu0 0.0
    %97 = vmatprep.subr.mxu0 0.0
    %98 = vmatpush1.msra.mxu0 0.0
    %99 = vmatprep.subr.mxu0 0.0
    %100 = vmatpush1.msra.mxu0 0.0
    %101 = vmatprep.subr.mxu0 0.0
    %102 = vmatpush1.msra.mxu0 0.0
    %103 = vmatprep.subr.mxu0 0.0
    %104 = vmatpush1.msra.mxu0 0.0
    %105 = vmatprep.subr.mxu0 0.0
    %106 = vmatpush1.msra.mxu0 0.0
    %107 = vmatprep.subr.mxu0 0.0
    %108 = vmatpush1.msra.mxu0 0.0
    %109 = vmatprep.subr.mxu0 0.0
    %110 = vmatpush1.msra.mxu0 0.0
    %111 = vmatprep.subr.mxu0 0.0
    %112 = vmatpush1.msra.mxu0 0.0
    %113 = vmatprep.subr.mxu0 0.0
    %114 = vmatpush1.msra.mxu0 0.0
    %115 = vmatprep.subr.mxu0 0.0
    %116 = vmatpush1.msra.mxu0 0.0
    %117 = vmatprep.subr.mxu0 0.0
    %118 = vmatpush1.msra.mxu0 0.0
    %119 = vmatprep.subr.mxu0 0.0
    %120 = vmatpush1.msra.mxu0 0.0
    %121 = vmatprep.subr.mxu0 0.0
    %122 = vmatpush1.msra.mxu0 0.0
    %123 = vmatprep.subr.mxu0 0.0
    %124 = vmatpush1.msra.mxu0 0.0
    %125 = vmatprep.subr.mxu0 0.0
    %126 = vmatpush1.msra.mxu0 0.0
    %127 = vmatprep.subr.mxu0 0.0
    %128 = vmatpush1.msra.mxu0 0.0
    %129 = vmatprep.subr.mxu0 0.0
    %130 = vmatpush1.msra.mxu0 0.0
    %131 = vmatprep.subr.mxu0 0.0
    %132 = vmatpush1.msra.mxu0 0.0
    %133 = vmatprep.subr.mxu0 0.0
    %134 = vmatpush1.msra.mxu0 0.0
    %135 = vmatprep.subr.mxu0 0.0
    %136 = vmatpush1.msra.mxu0 0.0
    %137 = vmatprep.subr.mxu0 0.0
    %138 = vmatpush1.msra.mxu0 0.0
    %139 = vmatprep.mubr.f32.mxu0 0.0
    %140 = vmatmul.mubr.f32.gmra.mrb[0].mxu0 %v73
    %v141 = vpop.f32.mrb[0].mxu0
    %v142 = vadd.f32 %v70, %v141
    %v143 = vpop.f32.mrb[0].mxu0
    %144 = vdwg.mxu0
    %v145 = vtanh.pop %v142
    %s146 = scalar_lea.vmem [#allocation2], 64
    %v147 = vld [vmem:[%s146] sm:$0xff]
    %v148 = vld [vmem:[%s146 + $0x8] sm:$0xff]
    %v149 = vld [vmem:[%s146 + $0x10] sm:$0xff]
    %v150 = vld [vmem:[%s146 + $0x18] sm:$0xff]
    %v151 = vld [vmem:[%s3 + $0x2] sm:$0x1]
    %v152 = vlaneseq
    %v153 = vshrl.u32 %v152, 7
    %v154 = vsub.s32 0, %v153
    %v155 = vrot.slane %v151, %v154
    %v157 = vsel %vm71, %v145, 0
    %159 = vmatprep.subr.mxu0 0.0
    %160 = vmatpush1.msra.mxu0 %v147
    %161 = vmatprep.subr.mxu0 0.0
    %162 = vmatpush1.msra.mxu0 %v148
    %163 = vmatprep.subr.mxu0 0.0
    %164 = vmatpush1.msra.mxu0 %v149
    %165 = vmatprep.subr.mxu0 0.0
    %166 = vmatpush1.msra.mxu0 %v150
    %167 = vmatprep.subr.mxu0 0.0
    %168 = vmatpush1.msra.mxu0 0.0
    %169 = vmatprep.subr.mxu0 0.0
    %170 = vmatpush1.msra.mxu0 0.0
    %171 = vmatprep.subr.mxu0 0.0
    %172 = vmatpush1.msra.mxu0 0.0
    %173 = vmatprep.subr.mxu0 0.0
    %174 = vmatpush1.msra.mxu0 0.0
    %175 = vmatprep.subr.mxu0 0.0
    %176 = vmatpush1.msra.mxu0 0.0
    %177 = vmatprep.subr.mxu0 0.0
    %178 = vmatpush1.msra.mxu0 0.0
    %179 = vmatprep.subr.mxu0 0.0
    %180 = vmatpush1.msra.mxu0 0.0
    %181 = vmatprep.subr.mxu0 0.0
    %182 = vmatpush1.msra.mxu0 0.0
    %183 = vmatprep.subr.mxu0 0.0
    %184 = vmatpush1.msra.mxu0 0.0
    %185 = vmatprep.subr.mxu0 0.0
    %186 = vmatpush1.msra.mxu0 0.0
    %187 = vmatprep.subr.mxu0 0.0
    %188 = vmatpush1.msra.mxu0 0.0
    %189 = vmatprep.subr.mxu0 0.0
    %190 = vmatpush1.msra.mxu0 0.0
    %191 = vmatprep.subr.mxu0 0.0
    %192 = vmatpush1.msra.mxu0 0.0
    %193 = vmatprep.subr.mxu0 0.0
    %194 = vmatpush1.msra.mxu0 0.0
    %195 = vmatprep.subr.mxu0 0.0
    %196 = vmatpush1.msra.mxu0 0.0
    %197 = vmatprep.subr.mxu0 0.0
    %198 = vmatpush1.msra.mxu0 0.0
    %199 = vmatprep.subr.mxu0 0.0
    %200 = vmatpush1.msra.mxu0 0.0
    %201 = vmatprep.subr.mxu0 0.0
    %202 = vmatpush1.msra.mxu0 0.0
    %203 = vmatprep.subr.mxu0 0.0
    %204 = vmatpush1.msra.mxu0 0.0
    %205 = vmatprep.subr.mxu0 0.0
    %206 = vmatpush1.msra.mxu0 0.0
    %207 = vmatprep.subr.mxu0 0.0
    %208 = vmatpush1.msra.mxu0 0.0
    %209 = vmatprep.subr.mxu0 0.0
    %210 = vmatpush1.msra.mxu0 0.0
    %211 = vmatprep.subr.mxu0 0.0
    %212 = vmatpush1.msra.mxu0 0.0
    %213 = vmatprep.subr.mxu0 0.0
    %214 = vmatpush1.msra.mxu0 0.0
    %215 = vmatprep.subr.mxu0 0.0
    %216 = vmatpush1.msra.mxu0 0.0
    %217 = vmatprep.subr.mxu0 0.0
    %218 = vmatpush1.msra.mxu0 0.0
    %219 = vmatprep.subr.mxu0 0.0
    %220 = vmatpush1.msra.mxu0 0.0
    %221 = vmatprep.subr.mxu0 0.0
    %222 = vmatpush1.msra.mxu0 0.0
    %223 = vmatprep.mubr.f32.mxu0 0.0
    %224 = vmatmul.mubr.f32.gmra.mrb[0].mxu0 %v157
    %v225 = vpop.f32.mrb[0].mxu0
    %v226 = vadd.f32 %v155, %v225
    %v227 = vpop.f32.mrb[0].mxu0
    %228 = vdwg.mxu0
    %v229 = vld [vmem:[%s1] sm:$0xff]
    %s230 = scalar_lea.vmem [#allocation2], 96
    %v231 = vld [vmem:[%s230] sm:$0x1]
    %v232 = vld [vmem:[%s3 + $0x3] sm:$0x1]
    %234 = vset.pattern.permute.xlu0 0
    %235 = vperm.xlu0 %234, %v229
    %v236 = vpop.permute.xlu0 %235
    %v238 = vlaneseq
    %v239 = vshrl.u32 %v238, 7
    %v240 = vsub.s32 0, %v239
    %v241 = vrot.slane %v231, %v240
    %v242 = vmul.f32 %v236, %v241
    %v243 = vlaneseq
    %v244 = vshrl.u32 %v243, 7
    %v245 = vsub.s32 0, %v244
    %v246 = vrot.slane %v232, %v245
    %v247 = vadd.f32 %v246, %v242
    %v248 = vtanh.pop %v247
    %s249 = scalar_lea.vmem [#allocation2], 128
    %v250 = vld [vmem:[%s249] sm:$0xff]
    %v251 = vld [vmem:[%s249 + $0x8] sm:$0xff]
    %v252 = vld [vmem:[%s249 + $0x10] sm:$0xff]
    %v253 = vld [vmem:[%s249 + $0x18] sm:$0xff]
    %v254 = vld [vmem:[%s3 + $0x4] sm:$0x1]
    %v255 = vlaneseq
    %v256 = vshrl.u32 %v255, 7
    %v257 = vsub.s32 0, %v256
    %v258 = vrot.slane %v254, %v257
    %v260 = vsel %vm71, %v248, 0
    %262 = vmatprep.subr.mxu0 0.0
    %263 = vmatpush1.msra.mxu0 %v250
    %264 = vmatprep.subr.mxu0 0.0
    %265 = vmatpush1.msra.mxu0 %v251
    %266 = vmatprep.subr.mxu0 0.0
    %267 = vmatpush1.msra.mxu0 %v252
    %268 = vmatprep.subr.mxu0 0.0
    %269 = vmatpush1.msra.mxu0 %v253
    %270 = vmatprep.subr.mxu0 0.0
    %271 = vmatpush1.msra.mxu0 0.0
    %272 = vmatprep.subr.mxu0 0.0
    %273 = vmatpush1.msra.mxu0 0.0
    %274 = vmatprep.subr.mxu0 0.0
    %275 = vmatpush1.msra.mxu0 0.0
    %276 = vmatprep.subr.mxu0 0.0
    %277 = vmatpush1.msra.mxu0 0.0
    %278 = vmatprep.subr.mxu0 0.0
    %279 = vmatpush1.msra.mxu0 0.0
    %280 = vmatprep.subr.mxu0 0.0
    %281 = vmatpush1.msra.mxu0 0.0
    %282 = vmatprep.subr.mxu0 0.0
    %283 = vmatpush1.msra.mxu0 0.0
    %284 = vmatprep.subr.mxu0 0.0
    %285 = vmatpush1.msra.mxu0 0.0
    %286 = vmatprep.subr.mxu0 0.0
    %287 = vmatpush1.msra.mxu0 0.0
    %288 = vmatprep.subr.mxu0 0.0
    %289 = vmatpush1.msra.mxu0 0.0
    %290 = vmatprep.subr.mxu0 0.0
    %291 = vmatpush1.msra.mxu0 0.0
    %292 = vmatprep.subr.mxu0 0.0
    %293 = vmatpush1.msra.mxu0 0.0
    %294 = vmatprep.subr.mxu0 0.0
    %295 = vmatpush1.msra.mxu0 0.0
    %296 = vmatprep.subr.mxu0 0.0
    %297 = vmatpush1.msra.mxu0 0.0
    %298 = vmatprep.subr.mxu0 0.0
    %299 = vmatpush1.msra.mxu0 0.0
    %300 = vmatprep.subr.mxu0 0.0
    %301 = vmatpush1.msra.mxu0 0.0
    %302 = vmatprep.subr.mxu0 0.0
    %303 = vmatpush1.msra.mxu0 0.0
    %304 = vmatprep.subr.mxu0 0.0
    %305 = vmatpush1.msra.mxu0 0.0
    %306 = vmatprep.subr.mxu0 0.0
    %307 = vmatpush1.msra.mxu0 0.0
    %308 = vmatprep.subr.mxu0 0.0
    %309 = vmatpush1.msra.mxu0 0.0
    %310 = vmatprep.subr.mxu0 0.0
    %311 = vmatpush1.msra.mxu0 0.0
    %312 = vmatprep.subr.mxu0 0.0
    %313 = vmatpush1.msra.mxu0 0.0
    %314 = vmatprep.subr.mxu0 0.0
    %315 = vmatpush1.msra.mxu0 0.0
    %316 = vmatprep.subr.mxu0 0.0
    %317 = vmatpush1.msra.mxu0 0.0
    %318 = vmatprep.subr.mxu0 0.0
    %319 = vmatpush1.msra.mxu0 0.0
    %320 = vmatprep.subr.mxu0 0.0
    %321 = vmatpush1.msra.mxu0 0.0
    %322 = vmatprep.subr.mxu0 0.0
    %323 = vmatpush1.msra.mxu0 0.0
    %324 = vmatprep.subr.mxu0 0.0
    %325 = vmatpush1.msra.mxu0 0.0
    %326 = vmatprep.mubr.f32.mxu0 0.0
    %327 = vmatmul.mubr.f32.gmra.mrb[0].mxu0 %v260
    %v328 = vpop.f32.mrb[0].mxu0
    %v329 = vadd.f32 %v258, %v328
    %v330 = vpop.f32.mrb[0].mxu0
    %331 = vdwg.mxu0
    %v332 = vtanh.pop %v329
    %s333 = scalar_lea.vmem [#allocation2], 160
    %v334 = vld [vmem:[%s333] sm:$0xff]
    %v335 = vld [vmem:[%s333 + $0x8] sm:$0xff]
    %v336 = vld [vmem:[%s333 + $0x10] sm:$0xff]
    %v337 = vld [vmem:[%s333 + $0x18] sm:$0xff]
    %v338 = vld [vmem:[%s3 + $0x5] sm:$0x1]
    %v339 = vlaneseq
    %v340 = vshrl.u32 %v339, 7
    %v341 = vsub.s32 0, %v340
    %v342 = vrot.slane %v338, %v341
    %v344 = vsel %vm71, %v332, 0
    %346 = vmatprep.subr.mxu0 0.0
    %347 = vmatpush1.msra.mxu0 %v334
    %348 = vmatprep.subr.mxu0 0.0
    %349 = vmatpush1.msra.mxu0 %v335
    %350 = vmatprep.subr.mxu0 0.0
    %351 = vmatpush1.msra.mxu0 %v336
    %352 = vmatprep.subr.mxu0 0.0
    %353 = vmatpush1.msra.mxu0 %v337
    %354 = vmatprep.subr.mxu0 0.0
    %355 = vmatpush1.msra.mxu0 0.0
    %356 = vmatprep.subr.mxu0 0.0
    %357 = vmatpush1.msra.mxu0 0.0
    %358 = vmatprep.subr.mxu0 0.0
    %359 = vmatpush1.msra.mxu0 0.0
    %360 = vmatprep.subr.mxu0 0.0
    %361 = vmatpush1.msra.mxu0 0.0
    %362 = vmatprep.subr.mxu0 0.0
    %363 = vmatpush1.msra.mxu0 0.0
    %364 = vmatprep.subr.mxu0 0.0
    %365 = vmatpush1.msra.mxu0 0.0
    %366 = vmatprep.subr.mxu0 0.0
    %367 = vmatpush1.msra.mxu0 0.0
    %368 = vmatprep.subr.mxu0 0.0
    %369 = vmatpush1.msra.mxu0 0.0
    %370 = vmatprep.subr.mxu0 0.0
    %371 = vmatpush1.msra.mxu0 0.0
    %372 = vmatprep.subr.mxu0 0.0
    %373 = vmatpush1.msra.mxu0 0.0
    %374 = vmatprep.subr.mxu0 0.0
    %375 = vmatpush1.msra.mxu0 0.0
    %376 = vmatprep.subr.mxu0 0.0
    %377 = vmatpush1.msra.mxu0 0.0
    %378 = vmatprep.subr.mxu0 0.0
    %379 = vmatpush1.msra.mxu0 0.0
    %380 = vmatprep.subr.mxu0 0.0
    %381 = vmatpush1.msra.mxu0 0.0
    %382 = vmatprep.subr.mxu0 0.0
    %383 = vmatpush1.msra.mxu0 0.0
    %384 = vmatprep.subr.mxu0 0.0
    %385 = vmatpush1.msra.mxu0 0.0
    %386 = vmatprep.subr.mxu0 0.0
    %387 = vmatpush1.msra.mxu0 0.0
    %388 = vmatprep.subr.mxu0 0.0
    %389 = vmatpush1.msra.mxu0 0.0
    %390 = vmatprep.subr.mxu0 0.0
    %391 = vmatpush1.msra.mxu0 0.0
    %392 = vmatprep.subr.mxu0 0.0
    %393 = vmatpush1.msra.mxu0 0.0
    %394 = vmatprep.subr.mxu0 0.0
    %395 = vmatpush1.msra.mxu0 0.0
    %396 = vmatprep.subr.mxu0 0.0
    %397 = vmatpush1.msra.mxu0 0.0
    %398 = vmatprep.subr.mxu0 0.0
    %399 = vmatpush1.msra.mxu0 0.0
    %400 = vmatprep.subr.mxu0 0.0
    %401 = vmatpush1.msra.mxu0 0.0
    %402 = vmatprep.subr.mxu0 0.0
    %403 = vmatpush1.msra.mxu0 0.0
    %404 = vmatprep.subr.mxu0 0.0
    %405 = vmatpush1.msra.mxu0 0.0
    %406 = vmatprep.subr.mxu0 0.0
    %407 = vmatpush1.msra.mxu0 0.0
    %408 = vmatprep.subr.mxu0 0.0
    %409 = vmatpush1.msra.mxu0 0.0
    %410 = vmatprep.mubr.f32.mxu0 0.0
    %411 = vmatmul.mubr.f32.gmra.mrb[0].mxu0 %v344
    %v412 = vpop.f32.mrb[0].mxu0
    %v413 = vadd.f32 %v342, %v412
    %v414 = vpop.f32.mrb[0].mxu0
    %415 = vdwg.mxu0
    %417 = vrot.lane.b32.xlu0 %v226, 2
    %v418 = vpop.permute.xlu0 %417
    %420 = vrot.lane.b32.xlu0 %v226, 4
    %v421 = vpop.permute.xlu0 %420
    %423 = vrot.lane.b32.xlu0 %v226, 6
    %v424 = vpop.permute.xlu0 %423
    %426 = vrot.lane.b32.xlu0 %v226, 8
    %v427 = vpop.permute.xlu0 %426
    %429 = vrot.lane.b32.xlu0 %v226, 10
    %v430 = vpop.permute.xlu0 %429
    %432 = vrot.lane.b32.xlu0 %v226, 12
    %v433 = vpop.permute.xlu0 %432
    %435 = vrot.lane.b32.xlu0 %v226, 14
    %v436 = vpop.permute.xlu0 %435
    %vm438 = vcmask 15360
    %v439 = vsel %vm438, %v226, %v418
    %vm440 = vcmask 31744
    %v441 = vsel %vm440, %v439, %v421
    %vm442 = vcmask 48128
    %v443 = vsel %vm442, %v441, %v424
    %vm444 = vcmask 64512
    %v445 = vsel %vm444, %v443, %v427
    %vm446 = vcmask 80896
    %v447 = vsel %vm446, %v445, %v430
    %vm448 = vcmask 97280
    %v449 = vsel %vm448, %v447, %v433
    %vm450 = vcmask 113664
    %v451 = vsel %vm450, %v449, %v436
    %453 = vset.pattern.permute.xlu0 0
    %454 = vperm.xlu0 %453, %v413
    %v455 = vpop.permute.xlu0 %454
    %v457 = vrot.slane %v455, 1
    %v459 = vrot.slane %v455, 2
    %v461 = vrot.slane %v455, 3
    %v463 = vrot.slane %v455, 4
    %v465 = vrot.slane %v455, 5
    %v467 = vrot.slane %v455, 6
    %v469 = vrot.slane %v455, 7
    %v471 = vsel %vm438, %v455, %v457
    %v472 = vsel %vm440, %v471, %v459
    %v473 = vsel %vm442, %v472, %v461
    %v474 = vsel %vm444, %v473, %v463
    %v475 = vsel %vm446, %v474, %v465
    %v476 = vsel %vm448, %v475, %v467
    %v477 = vsel %vm450, %v476, %v469
    %v478 = vlaneseq
    %v479 = vshrl.u32 %v478, 7
    %v480 = vsub.s32 0, %v479
    %v481 = vrot.slane %v477, %v480
    %v482 = vmul.f32 %v451, %v481
    %v483 = vadd.f32 %v482, 0.0
    %484 = vrot.lane.b32.xlu0 %v226, 126
    %v485 = vpop.permute.xlu0 %484
    %v487 = vsel %vm438, %v485, %v226
    %v488 = vsel %vm440, %v487, %v418
    %v489 = vsel %vm442, %v488, %v421
    %v490 = vsel %vm444, %v489, %v424
    %v491 = vsel %vm446, %v490, %v427
    %v492 = vsel %vm448, %v491, %v430
    %v493 = vsel %vm450, %v492, %v433
    %494 = vset.pattern.permute.xlu0 1
    %495 = vperm.xlu0 %494, %v413
    %v496 = vpop.permute.xlu0 %495
    %v498 = vrot.slane %v496, 1
    %v500 = vrot.slane %v496, 2
    %v502 = vrot.slane %v496, 3
    %v504 = vrot.slane %v496, 4
    %v506 = vrot.slane %v496, 5
    %v508 = vrot.slane %v496, 6
    %v510 = vrot.slane %v496, 7
    %v512 = vsel %vm438, %v496, %v498
    %v513 = vsel %vm440, %v512, %v500
    %v514 = vsel %vm442, %v513, %v502
    %v515 = vsel %vm444, %v514, %v504
    %v516 = vsel %vm446, %v515, %v506
    %v517 = vsel %vm448, %v516, %v508
    %v518 = vsel %vm450, %v517, %v510
    %v519 = vlaneseq
    %v520 = vshrl.u32 %v519, 7
    %v521 = vsub.s32 0, %v520
    %v522 = vrot.slane %v518, %v521
    %v523 = vmul.f32 %v493, %v522
    %v524 = vadd.f32 %v483, %v523
    %vm525 = vcmask 130048
    %526 = vst.msk [vmem:[#allocation5] sm:$0xff] %vm525, %v524
    // Predicated region
    $region22: #{tpu_custom_call.1} parent=1 // pred_check
      _
    $region23: #{tpu_custom_call.1} parent=1 // pred_check_branch
      %528 = sbr.rel (0) target = $region25
    $region24: #{tpu_custom_call.1} parent=1 // pred_region
      %s530 = ssub.s32 128, 128
      %531 = vsyncadd [#allocation4], %s530
      %s533 = sshll.u32 [#allocation5], 4
      %s534 = int_to_ptr.vmem [resolvable:$true] %s533
      %536 = dma.vmem_to_hbm [thread:$0]  %s534, 128, %s4, [#allocation4]
    $region25: #{tpu_custom_call.1} parent=1 // pred_fallthru
      _
    // Predicated region
    $region26: #{tpu_custom_call.1} parent=1 // pred_check
      _
    $region27: #{tpu_custom_call.1} parent=1 // pred_check_branch
      %538 = sbr.rel (0) target = $region29
    $region28: #{tpu_custom_call.1} parent=1 // pred_region
      %539 = dma.done [#allocation4], 128
    $region29: #{tpu_custom_call.1} parent=1 // pred_fallthru
      _
    %540 = vsyncpa [#allocation3], 1
    %541 = vsyncpa [#allocation4], 1

</llo_original>
